<compile_context>
chip_gen: v7x
topology: tpu7x:2x2x1
jax: 0.10.0
libtpu: 0.0.40
codegen_flags: <defaults>
</compile_context>

<pallas_src>
import functools

import jax
import jax.numpy as jnp
from jax.experimental import pallas as pl
from jax.experimental.pallas import tpu as pltpu

_LANES = 128  # lane width of a vreg; batch tiles are aligned to this


def _round_up(x, m):
    return ((x + m - 1) // m) * m


def _cdiv(a, b):
    return -(-a // b)


def _actor_mlp_kernel(xt_ref, w1_ref, b1_ref, w2_ref, b2_ref, w3_ref, b3_ref,
                      out_ref):
    """One batch tile; batch lives on the 128-lane axis.

    xt_ref : (obs, tb)   bf16  streamed input tile
    wN_ref : (out, in)   bf16  VMEM-resident transposed weights
    bN_ref : (out, 1)    f32   VMEM-resident biases (lane-broadcast)
    out_ref: (act, tb)   bf16  lane-dense output tile
    """
    xt = xt_ref[...]                                                   # bf16

    h = jnp.dot(w1_ref[...], xt, preferred_element_type=jnp.float32)  # (h1,tb)
    h = jnp.maximum(h + b1_ref[...], 0.0)                             # ReLU f32

    h = jnp.dot(w2_ref[...], h.astype(jnp.bfloat16),
                preferred_element_type=jnp.float32)                   # (h2,tb)
    h = jnp.maximum(h + b2_ref[...], 0.0)                             # ReLU f32

    h = jnp.dot(w3_ref[...], h.astype(jnp.bfloat16),
                preferred_element_type=jnp.float32)                   # (act,tb)
    # f32 tanh (v5e has no bf16 EUP); only ~ceil(act/8) * tb/128 vregs go
    # through the EUP thanks to the transposed (lane-dense) layout.
    out_ref[...] = jnp.tanh(h + b3_ref[...]).astype(out_ref.dtype)


def prepare_actor_params(w1, b1, w2, b2, w3, b3):
    """One-time parameter prep (hoisted off the per-call critical path).

    Weights are given as (in, out), biases as (1, out) or (out,).  Returns the
    batch-transposed, bf16-cast parameter tuple consumed by actor_mlp_forward.
    """
    def _wt(w):
        return jnp.asarray(w).T.astype(jnp.bfloat16)               # (out, in)

    def _bt(b):
        return jnp.asarray(b).reshape(-1, 1).astype(jnp.float32)   # (out, 1)

    return (_wt(w1), _bt(b1), _wt(w2), _bt(b2), _wt(w3), _bt(b3))


@functools.partial(jax.jit, static_argnames=("tile_b",))
def _forward_prepared(state, w1t, b1t, w2t, b2t, w3t, b3t, *, tile_b=1024):
    batch, obs = state.shape
    h1 = w1t.shape[0]
    h2 = w2t.shape[0]
    act = w3t.shape[0]

    # ---- adaptive, 128-aligned batch tiling --------------------------------
    tile_b = max(_LANES, _round_up(int(tile_b), _LANES))
    batch_aligned = _round_up(batch, _LANES)
    ntiles = _cdiv(batch_aligned, tile_b)
    # v7x megacore: a single grid step leaves one TensorCore idle; force >= 2
    # steps when there is enough batch to split (costs one ~0.35us grid step
    # and a little padding on single-TC v5e/v6e).
    if ntiles == 1 and batch_aligned >= 2 * _LANES:
        ntiles = 2
    tb = _round_up(_cdiv(batch, ntiles), _LANES)
    batch_p = ntiles * tb

    # ---- input: (batch, obs) f32 -> (obs, batch_p) bf16 (one tiny pass) ----
    xt = state.T.astype(jnp.bfloat16)
    if batch_p != batch:
        xt = jnp.pad(xt, ((0, 0), (0, batch_p - batch)))

    const = lambda i: (0, 0)   # weights/biases: DMA once, stay VMEM-resident
    out_t = pl.pallas_call(
        _actor_mlp_kernel,
        out_shape=jax.ShapeDtypeStruct((act, batch_p), jnp.bfloat16),
        grid=(ntiles,),
        in_specs=[
            pl.BlockSpec((obs, tb), lambda i: (0, i)),   # streamed x^T tile
            pl.BlockSpec((h1, obs), const),
            pl.BlockSpec((h1, 1), const),
            pl.BlockSpec((h2, h1), const),
            pl.BlockSpec((h2, 1), const),
            pl.BlockSpec((act, h2), const),
            pl.BlockSpec((act, 1), const),
        ],
        out_specs=pl.BlockSpec((act, tb), lambda i: (0, i)),
        compiler_params=pltpu.CompilerParams(
            dimension_semantics=("parallel",)),          # megacore sharding (v7x)
    )(xt, w1t, b1t, w2t, b2t, w3t, b3t)

    # Tiny epilogue: drop batch padding, back to (batch, act) f32.
    return out_t[:, :batch].T.astype(jnp.float32)


def actor_mlp_forward(state, prepared_params, *, tile_b=1024):
    """state: (B, obs) f32 -> action: (B, action_size) f32 in [-1, 1]."""
    return _forward_prepared(state, *prepared_params, tile_b=tile_b)


def init_params(key, observation_size, hiddens, action_size):
    """Deterministic synthetic params. Weights stored (in, out); bias (1, out)."""
    dims = [observation_size] + list(hiddens) + [action_size]
    params = []
    for i in range(len(dims) - 1):
        key, wk, bk = jax.random.split(key, 3)
        fan_in = dims[i]
        scale = 1.0 / jnp.sqrt(jnp.float32(fan_in))
        w = jax.random.uniform(wk, (dims[i], dims[i + 1]), jnp.float32,
                               minval=-scale, maxval=scale)
        b = jax.random.uniform(bk, (1, dims[i + 1]), jnp.float32,
                               minval=-scale, maxval=scale)
        params.append((w, b))
    return params


def reference_forward(state, params, *, bf16_matmul=True):
    """Pure-JAX reference; bf16_matmul mirrors the kernel's mixed precision."""
    h = state
    for i, (w, b) in enumerate(params):
        if bf16_matmul:
            h = jnp.dot(h.astype(jnp.bfloat16), w.astype(jnp.bfloat16),
                        preferred_element_type=jnp.float32) + b
        else:
            h = h @ w + b
        if i < len(params) - 1:
            h = jnp.maximum(h, 0.0)
        else:
            h = jnp.tanh(h)
    return h


if __name__ == "__main__":
    # Small shapes consistent with the module's forward.
    batch = 2
    observation_size = 8
    actor_hiddens = (32, 32)
    action_size = 4

    key = jax.random.PRNGKey(0)
    key, xk = jax.random.split(key)
    state = jax.random.normal(xk, (batch, observation_size), jnp.float32)

    params = init_params(key, observation_size, actor_hiddens, action_size)
    (w1, b1), (w2, b2), (w3, b3) = params

    prepared = prepare_actor_params(w1, b1, w2, b2, w3, b3)   # one-time prep

    out = actor_mlp_forward(state, prepared)
    out = jax.block_until_ready(out)
    assert out.shape == (batch, action_size)
    assert out.dtype == jnp.float32

    ref_bf16 = reference_forward(state, params, bf16_matmul=True)
    ref_f32 = reference_forward(state, params, bf16_matmul=False)
    assert jnp.allclose(out, ref_bf16, atol=5e-3, rtol=5e-3), "mismatch (bf16 ref)"
    assert jnp.allclose(out, ref_f32, atol=3e-2, rtol=3e-2), "mismatch (f32 ref)"

    # Multi-tile grid path + ragged batch (B not a multiple of the tile).
    key, xk2 = jax.random.split(key)
    big_batch = 600
    state_big = jax.random.normal(xk2, (big_batch, observation_size), jnp.float32)
    ref_big = reference_forward(state_big, params, bf16_matmul=True)

    out_big = actor_mlp_forward(state_big, prepared, tile_b=256)   # 3 tiles of 256
    out_big = jax.block_until_ready(out_big)
    assert out_big.shape == (big_batch, action_size)
    assert jnp.allclose(out_big, ref_big, atol=5e-3, rtol=5e-3), "mismatch (grid)"

    # Default tiling: forced 2-tile split so v7x megacore uses both cores.
    out_big2 = jax.block_until_ready(actor_mlp_forward(state_big, prepared))
    assert out_big2.shape == (big_batch, action_size)
    assert jnp.allclose(out_big2, ref_big, atol=5e-3, rtol=5e-3), "mismatch (2-tile)"

    print("KERNEL_OK")
</pallas_src>

<mosaic_0001>
module attributes {stable_mosaic.version = 11 : i64} {
  func.func @_actor_mlp_kernel(%arg0: i32, %arg1: memref<8x128xbf16, #tpu.memory_space<vmem>>, %arg2: memref<32x8xbf16, #tpu.memory_space<vmem>>, %arg3: memref<32x1xf32, #tpu.memory_space<vmem>>, %arg4: memref<32x32xbf16, #tpu.memory_space<vmem>>, %arg5: memref<32x1xf32, #tpu.memory_space<vmem>>, %arg6: memref<4x32xbf16, #tpu.memory_space<vmem>>, %arg7: memref<4x1xf32, #tpu.memory_space<vmem>>, %arg8: memref<4x128xbf16, #tpu.memory_space<vmem>>) attributes {dimension_semantics = [#tpu.dimension_semantics<parallel>], iteration_bounds = array<i64: 1>, scalar_prefetch = 0 : i64, scratch_operands = 0 : i64, tpu.core_type = #tpu.core_type<tc>, window_params = [{transform_indices = @transform_0, window_bounds = array<i64: 8, 128>}, {pipeline_mode = #tpu.pipeline_mode<synchronous>, transform_indices = @transform_1, window_bounds = array<i64: 32, 8>}, {pipeline_mode = #tpu.pipeline_mode<synchronous>, transform_indices = @transform_2, window_bounds = array<i64: 32, 1>}, {pipeline_mode = #tpu.pipeline_mode<synchronous>, transform_indices = @transform_3, window_bounds = array<i64: 32, 32>}, {pipeline_mode = #tpu.pipeline_mode<synchronous>, transform_indices = @transform_4, window_bounds = array<i64: 32, 1>}, {pipeline_mode = #tpu.pipeline_mode<synchronous>, transform_indices = @transform_5, window_bounds = array<i64: 4, 32>}, {pipeline_mode = #tpu.pipeline_mode<synchronous>, transform_indices = @transform_6, window_bounds = array<i64: 4, 1>}, {transform_indices = @transform_7, window_bounds = array<i64: 4, 128>}]} {
    %c0 = arith.constant 0 : index
    %c0_0 = arith.constant 0 : index
    %0 = vector.load %arg1[%c0, %c0_0] : memref<8x128xbf16, #tpu.memory_space<vmem>>, vector<8x128xbf16>
    %c0_1 = arith.constant 0 : index
    %c0_2 = arith.constant 0 : index
    %1 = vector.load %arg2[%c0_1, %c0_2] : memref<32x8xbf16, #tpu.memory_space<vmem>>, vector<32x8xbf16>
    %cst = arith.constant dense<0.000000e+00> : vector<32x128xf32>
    %2 = tpu.matmul %1, %0, %cst {dimension_numbers = #tpu.dot_dimension_numbers<[1], [0], [0], [1], [0, 0, 1, 1], [], []>} : vector<32x8xbf16>, vector<8x128xbf16>, vector<32x128xf32> -> vector<32x128xf32>
    %c0_3 = arith.constant 0 : index
    %c0_4 = arith.constant 0 : index
    %3 = vector.load %arg3[%c0_3, %c0_4] : memref<32x1xf32, #tpu.memory_space<vmem>>, vector<32x1xf32>
    %4 = vector.broadcast %3 : vector<32x1xf32> to vector<32x128xf32>
    %5 = arith.addf %2, %4 : vector<32x128xf32>
    %cst_5 = arith.constant 0.000000e+00 : f32
    %6 = vector.broadcast %cst_5 : f32 to vector<32x128xf32>
    %7 = arith.maximumf %5, %6 : vector<32x128xf32>
    %c0_6 = arith.constant 0 : index
    %c0_7 = arith.constant 0 : index
    %8 = vector.load %arg4[%c0_6, %c0_7] : memref<32x32xbf16, #tpu.memory_space<vmem>>, vector<32x32xbf16>
    %9 = arith.truncf %7 : vector<32x128xf32> to vector<32x128xbf16>
    %cst_8 = arith.constant dense<0.000000e+00> : vector<32x128xf32>
    %10 = tpu.matmul %8, %9, %cst_8 {dimension_numbers = #tpu.dot_dimension_numbers<[1], [0], [0], [1], [0, 0, 1, 1], [], []>} : vector<32x32xbf16>, vector<32x128xbf16>, vector<32x128xf32> -> vector<32x128xf32>
    %c0_9 = arith.constant 0 : index
    %c0_10 = arith.constant 0 : index
    %11 = vector.load %arg5[%c0_9, %c0_10] : memref<32x1xf32, #tpu.memory_space<vmem>>, vector<32x1xf32>
    %12 = vector.broadcast %11 : vector<32x1xf32> to vector<32x128xf32>
    %13 = arith.addf %10, %12 : vector<32x128xf32>
    %cst_11 = arith.constant 0.000000e+00 : f32
    %14 = vector.broadcast %cst_11 : f32 to vector<32x128xf32>
    %15 = arith.maximumf %13, %14 : vector<32x128xf32>
    %c0_12 = arith.constant 0 : index
    %c0_13 = arith.constant 0 : index
    %16 = vector.load %arg6[%c0_12, %c0_13] : memref<4x32xbf16, #tpu.memory_space<vmem>>, vector<4x32xbf16>
    %17 = arith.truncf %15 : vector<32x128xf32> to vector<32x128xbf16>
    %cst_14 = arith.constant dense<0.000000e+00> : vector<4x128xf32>
    %18 = tpu.matmul %16, %17, %cst_14 {dimension_numbers = #tpu.dot_dimension_numbers<[1], [0], [0], [1], [0, 0, 1, 1], [], []>} : vector<4x32xbf16>, vector<32x128xbf16>, vector<4x128xf32> -> vector<4x128xf32>
    %c0_15 = arith.constant 0 : index
    %c0_16 = arith.constant 0 : index
    %19 = vector.load %arg7[%c0_15, %c0_16] : memref<4x1xf32, #tpu.memory_space<vmem>>, vector<4x1xf32>
    %20 = vector.broadcast %19 : vector<4x1xf32> to vector<4x128xf32>
    %21 = arith.addf %18, %20 : vector<4x128xf32>
    %22 = math.tanh %21 : vector<4x128xf32>
    %23 = arith.truncf %22 : vector<4x128xf32> to vector<4x128xbf16>
    %c0_17 = arith.constant 0 : index
    %c0_18 = arith.constant 0 : index
    %24 = vector.load %arg8[%c0_17, %c0_18] : memref<4x128xbf16, #tpu.memory_space<vmem>>, vector<4x128xbf16>
    tpu.vector_store %arg8[%c0_17, %c0_18], %23 {strides = array<i32>} : memref<4x128xbf16, #tpu.memory_space<vmem>>, vector<4x128xbf16>,
    return
  }
  func.func @transform_0(%arg0: i32) -> (i32, i32) {
    %c0_i32 = arith.constant 0 : i32
    %c0_i32_0 = arith.constant 0 : i32
    return %c0_i32, %arg0 : i32, i32
  }
  func.func @transform_1(%arg0: i32) -> (i32, i32) {
    %c0_i32 = arith.constant 0 : i32
    %c0_i32_0 = arith.constant 0 : i32
    %c0_i32_1 = arith.constant 0 : i32
    return %c0_i32, %c0_i32_0 : i32, i32
  }
  func.func @transform_2(%arg0: i32) -> (i32, i32) {
    %c0_i32 = arith.constant 0 : i32
    %c0_i32_0 = arith.constant 0 : i32
    %c0_i32_1 = arith.constant 0 : i32
    return %c0_i32, %c0_i32_0 : i32, i32
  }
  func.func @transform_3(%arg0: i32) -> (i32, i32) {
    %c0_i32 = arith.constant 0 : i32
    %c0_i32_0 = arith.constant 0 : i32
    %c0_i32_1 = arith.constant 0 : i32
    return %c0_i32, %c0_i32_0 : i32, i32
  }
  func.func @transform_4(%arg0: i32) -> (i32, i32) {
    %c0_i32 = arith.constant 0 : i32
    %c0_i32_0 = arith.constant 0 : i32
    %c0_i32_1 = arith.constant 0 : i32
    return %c0_i32, %c0_i32_0 : i32, i32
  }
  func.func @transform_5(%arg0: i32) -> (i32, i32) {
    %c0_i32 = arith.constant 0 : i32
    %c0_i32_0 = arith.constant 0 : i32
    %c0_i32_1 = arith.constant 0 : i32
    return %c0_i32, %c0_i32_0 : i32, i32
  }
  func.func @transform_6(%arg0: i32) -> (i32, i32) {
    %c0_i32 = arith.constant 0 : i32
    %c0_i32_0 = arith.constant 0 : i32
    %c0_i32_1 = arith.constant 0 : i32
    return %c0_i32, %c0_i32_0 : i32, i32
  }
  func.func @transform_7(%arg0: i32) -> (i32, i32) {
    %c0_i32 = arith.constant 0 : i32
    %c0_i32_0 = arith.constant 0 : i32
    return %c0_i32, %arg0 : i32, i32
  }
}

</mosaic_0001>

<llo_original>
// kernel: _forward_prepared.1
$region0: #{_forward_prepared.1}
  #allocation0 [shape = 'u32[]', space=smem, size = 0x4, offset = 0x4, fixed_abs, tag = 'smem constant byte address 0x4 - core index']
  #allocation1 [shape = 'u32[144,128]{1,0:T(1,128)}', space=vmem, size = 0x12000, scoped, tag = 'internal scratch']
  %s0 = inlined_call_operand.vmem [shape: bf16[8,128], index: 0, kind: input, shape index: {}]
  %s1 = inlined_call_operand.vmem [shape: bf16[32,8], index: 1, kind: input, shape index: {}]
  %s2 = inlined_call_operand.vmem [shape: f32[32,1], index: 2, kind: input, shape index: {}]
  %s3 = inlined_call_operand.vmem [shape: bf16[32,32], index: 3, kind: input, shape index: {}]
  %s4 = inlined_call_operand.vmem [shape: f32[32,1], index: 4, kind: input, shape index: {}]
  %s5 = inlined_call_operand.vmem [shape: bf16[4,32], index: 5, kind: input, shape index: {}]
  %s6 = inlined_call_operand.vmem [shape: f32[4,1], index: 6, kind: input, shape index: {}]
  %s7 = inlined_call_operand.vmem [shape: bf16[4,128], index: 7, kind: output, shape index: {}]
  %s8 = sld [smem:[#allocation0]]
  $region38: #{_forward_prepared.1} parent=0
    _
  %s10 = ssub.s32 1, %s8
  %s11 = scalar_select 0, %s10, %s8
  // Predicated region
  $region2: #{_forward_prepared.1} parent=0 // pred_check
    _
  $region3: #{_forward_prepared.1} parent=0 // pred_check_branch
    %13 = sbr.rel (0) target = $region5
  $region4: #{_forward_prepared.1} parent=0 // pred_region
    _
  $region5: #{_forward_prepared.1} parent=0 // pred_fallthru
    _
  // Predicated region
  $region6: #{_forward_prepared.1} parent=0 // pred_check
    _
  $region7: #{_forward_prepared.1} parent=0 // pred_check_branch
    %15 = sbr.rel (0) target = $region9
  $region8: #{_forward_prepared.1} parent=0 // pred_region
    _
  $region9: #{_forward_prepared.1} parent=0 // pred_fallthru
    _
  // Predicated region
  $region10: #{_forward_prepared.1} parent=0 // pred_check
    _
  $region11: #{_forward_prepared.1} parent=0 // pred_check_branch
    %17 = sbr.rel (0) target = $region13
  $region12: #{_forward_prepared.1} parent=0 // pred_region
    _
  $region13: #{_forward_prepared.1} parent=0 // pred_fallthru
    _
  // Predicated region
  $region14: #{_forward_prepared.1} parent=0 // pred_check
    _
  $region15: #{_forward_prepared.1} parent=0 // pred_check_branch
    %19 = sbr.rel (0) target = $region17
  $region16: #{_forward_prepared.1} parent=0 // pred_region
    _
  $region17: #{_forward_prepared.1} parent=0 // pred_fallthru
    _
  // Predicated region
  $region18: #{_forward_prepared.1} parent=0 // pred_check
    _
  $region19: #{_forward_prepared.1} parent=0 // pred_check_branch
    %21 = sbr.rel (0) target = $region21
  $region20: #{_forward_prepared.1} parent=0 // pred_region
    _
  $region21: #{_forward_prepared.1} parent=0 // pred_fallthru
    _
  // Predicated region
  $region22: #{_forward_prepared.1} parent=0 // pred_check
    _
  $region23: #{_forward_prepared.1} parent=0 // pred_check_branch
    %23 = sbr.rel (0) target = $region25
  $region24: #{_forward_prepared.1} parent=0 // pred_region
    _
  $region25: #{_forward_prepared.1} parent=0 // pred_fallthru
    _
  // Predicated region
  $region26: #{_forward_prepared.1} parent=0 // pred_check
    _
  $region27: #{_forward_prepared.1} parent=0 // pred_check_branch
    %25 = sbr.rel (0) target = $region29
  $region28: #{_forward_prepared.1} parent=0 // pred_region
    _
  $region29: #{_forward_prepared.1} parent=0 // pred_fallthru
    _
  %v27 = vld [vmem:[%s0] sm:$0xf]
  %v28 = vld [vmem:[%s1] sm:$0xf]
  %v29 = vld [vmem:[%s1 + $0x4] sm:$0xf]
  %v30 = vld [vmem:[%s1 + $0x8] sm:$0xf]
  %v31 = vld [vmem:[%s1 + $0xc] sm:$0xf]
  %v32 = vld [vmem:[%s2] sm:$0xff]
  %v33 = vld [vmem:[%s2 + $0x8] sm:$0xff]
  %v34 = vld [vmem:[%s2 + $0x10] sm:$0xff]
  %v35 = vld [vmem:[%s2 + $0x18] sm:$0xff]
  %37 = vset.pattern.permute.xlu0 0
  %38 = vperm.xlu0 %37, %v32
  %v39 = vpop.permute.xlu0 %38
  %42 = vset.pattern.permute.xlu0 0
  %43 = vperm.xlu0 %42, %v33
  %v44 = vpop.permute.xlu0 %43
  %47 = vset.pattern.permute.xlu0 0
  %48 = vperm.xlu0 %47, %v34
  %v49 = vpop.permute.xlu0 %48
  %52 = vset.pattern.permute.xlu0 0
  %53 = vperm.xlu0 %52, %v35
  %v54 = vpop.permute.xlu0 %53
  %v60 = vunpack.c.l.b16 %v28
  %v61 = vunpack.c.l.b16 %v29
  %v62 = vunpack.c.l.b16 %v30
  %v63 = vunpack.c.l.b16 %v31
  %v64 = vpack.c.b16 %v61, %v60
  %v65 = vpack.c.b16 %v63, %v62
  %vm66 = vcmask 64512
  %v68 = vsel %vm66, %v64, 0
  %v71 = vsel %vm66, %v65, 0
  %vm73 = vcmask 1043456
  %v75 = vsel %vm73, %v27, 0
  %77 = vmatprep.subr.bf16.mxu0 0
  %78 = vmatpush1.bf16.msra.mxu0 %v75
  %79 = vmatprep.subr.bf16.mxu0 0
  %80 = vmatpush1.bf16.msra.mxu0 0
  %81 = vmatprep.subr.bf16.mxu0 0
  %82 = vmatpush1.bf16.msra.mxu0 0
  %83 = vmatprep.subr.bf16.mxu0 0
  %84 = vmatpush1.bf16.msra.mxu0 0
  %85 = vmatprep.subr.bf16.mxu0 0
  %86 = vmatpush1.bf16.msra.mxu0 0
  %87 = vmatprep.subr.bf16.mxu0 0
  %88 = vmatpush1.bf16.msra.mxu0 0
  %89 = vmatprep.subr.bf16.mxu0 0
  %90 = vmatpush1.bf16.msra.mxu0 0
  %91 = vmatprep.subr.bf16.mxu0 0
  %92 = vmatpush1.bf16.msra.mxu0 0
  %93 = vmatprep.subr.bf16.mxu0 0
  %94 = vmatpush1.bf16.msra.mxu0 0
  %95 = vmatprep.subr.bf16.mxu0 0
  %96 = vmatpush1.bf16.msra.mxu0 0
  %97 = vmatprep.subr.bf16.mxu0 0
  %98 = vmatpush1.bf16.msra.mxu0 0
  %99 = vmatprep.subr.bf16.mxu0 0
  %100 = vmatpush1.bf16.msra.mxu0 0
  %101 = vmatprep.subr.bf16.mxu0 0
  %102 = vmatpush1.bf16.msra.mxu0 0
  %103 = vmatprep.subr.bf16.mxu0 0
  %104 = vmatpush1.bf16.msra.mxu0 0
  %105 = vmatprep.subr.bf16.mxu0 0
  %106 = vmatpush1.bf16.msra.mxu0 0
  %107 = vmatprep.subr.bf16.mxu0 0
  %108 = vmatpush1.bf16.msra.mxu0 0
  %109 = vmatprep.mubr.bf16.mxu0 0
  %110 = vmatmul.mubr.bf16.gmra.mrb[0].mxu0 %v68
  %v111 = vpop.f32.mrb[0].mxu0
  %v112 = vadd.f32 %v39, %v111
  %v113 = vpop.f32.mrb[0].mxu0
  %v114 = vpop.f32.mrb[0].mxu0
  %v115 = vadd.f32 %v44, %v114
  %v116 = vpop.f32.mrb[0].mxu0
  %117 = vmatprep.mubr.bf16.mxu0 0
  %118 = vmatmul.mubr.bf16.gmra.mrb[0].mxu0 %v71
  %v119 = vpop.f32.mrb[0].mxu0
  %v120 = vadd.f32 %v49, %v119
  %v121 = vpop.f32.mrb[0].mxu0
  %v122 = vpop.f32.mrb[0].mxu0
  %v123 = vadd.f32 %v54, %v122
  %v124 = vpop.f32.mrb[0].mxu0
  %125 = vdwg.mxu0
  %v126 = vmax.f32 %v112, 0.0
  %v127 = vmax.f32 %v115, 0.0
  %v128 = vmax.f32 %v120, 0.0
  %v129 = vmax.f32 %v123, 0.0
  %v130 = vld [vmem:[%s3] sm:$0xf]
  %v131 = vld [vmem:[%s3 + $0x4] sm:$0xf]
  %v132 = vld [vmem:[%s3 + $0x8] sm:$0xf]
  %v133 = vld [vmem:[%s3 + $0xc] sm:$0xf]
  %v134 = vpack.c.bf16 %v127, %v126
  %v135 = vpack.c.bf16 %v129, %v128
  %v136 = vld [vmem:[%s4] sm:$0xff]
  %v137 = vld [vmem:[%s4 + $0x8] sm:$0xff]
  %v138 = vld [vmem:[%s4 + $0x10] sm:$0xff]
  %v139 = vld [vmem:[%s4 + $0x18] sm:$0xff]
  %141 = vset.pattern.permute.xlu0 0
  %142 = vperm.xlu0 %141, %v136
  %v143 = vpop.permute.xlu0 %142
  %146 = vset.pattern.permute.xlu0 0
  %147 = vperm.xlu0 %146, %v137
  %v148 = vpop.permute.xlu0 %147
  %151 = vset.pattern.permute.xlu0 0
  %152 = vperm.xlu0 %151, %v138
  %v153 = vpop.permute.xlu0 %152
  %156 = vset.pattern.permute.xlu0 0
  %157 = vperm.xlu0 %156, %v139
  %v158 = vpop.permute.xlu0 %157
  %v164 = vunpack.c.l.b16 %v130
  %v165 = vunpack.c.l.b16 %v131
  %v166 = vunpack.c.l.b16 %v132
  %v167 = vunpack.c.l.b16 %v133
  %v168 = vpack.c.b16 %v165, %v164
  %v169 = vpack.c.b16 %v167, %v166
  %vm170 = vcmask 261120
  %v172 = vsel %vm170, %v168, 0
  %v175 = vsel %vm170, %v169, 0
  %177 = vmatprep.subr.bf16.mxu0 0
  %178 = vmatpush1.bf16.msra.mxu0 %v134
  %179 = vmatprep.subr.bf16.mxu0 0
  %180 = vmatpush1.bf16.msra.mxu0 %v135
  %181 = vmatprep.subr.bf16.mxu0 0
  %182 = vmatpush1.bf16.msra.mxu0 0
  %183 = vmatprep.subr.bf16.mxu0 0
  %184 = vmatpush1.bf16.msra.mxu0 0
  %185 = vmatprep.subr.bf16.mxu0 0
  %186 = vmatpush1.bf16.msra.mxu0 0
  %187 = vmatprep.subr.bf16.mxu0 0
  %188 = vmatpush1.bf16.msra.mxu0 0
  %189 = vmatprep.subr.bf16.mxu0 0
  %190 = vmatpush1.bf16.msra.mxu0 0
  %191 = vmatprep.subr.bf16.mxu0 0
  %192 = vmatpush1.bf16.msra.mxu0 0
  %193 = vmatprep.subr.bf16.mxu0 0
  %194 = vmatpush1.bf16.msra.mxu0 0
  %195 = vmatprep.subr.bf16.mxu0 0
  %196 = vmatpush1.bf16.msra.mxu0 0
  %197 = vmatprep.subr.bf16.mxu0 0
  %198 = vmatpush1.bf16.msra.mxu0 0
  %199 = vmatprep.subr.bf16.mxu0 0
  %200 = vmatpush1.bf16.msra.mxu0 0
  %201 = vmatprep.subr.bf16.mxu0 0
  %202 = vmatpush1.bf16.msra.mxu0 0
  %203 = vmatprep.subr.bf16.mxu0 0
  %204 = vmatpush1.bf16.msra.mxu0 0
  %205 = vmatprep.subr.bf16.mxu0 0
  %206 = vmatpush1.bf16.msra.mxu0 0
  %207 = vmatprep.subr.bf16.mxu0 0
  %208 = vmatpush1.bf16.msra.mxu0 0
  %209 = vmatprep.mubr.bf16.mxu0 0
  %210 = vmatmul.mubr.bf16.gmra.mrb[0].mxu0 %v172
  %v211 = vpop.f32.mrb[0].mxu0
  %v212 = vadd.f32 %v143, %v211
  %v213 = vpop.f32.mrb[0].mxu0
  %v214 = vpop.f32.mrb[0].mxu0
  %v215 = vadd.f32 %v148, %v214
  %v216 = vpop.f32.mrb[0].mxu0
  %217 = vmatprep.mubr.bf16.mxu0 0
  %218 = vmatmul.mubr.bf16.gmra.mrb[0].mxu0 %v175
  %v219 = vpop.f32.mrb[0].mxu0
  %v220 = vadd.f32 %v153, %v219
  %v221 = vpop.f32.mrb[0].mxu0
  %v222 = vpop.f32.mrb[0].mxu0
  %v223 = vadd.f32 %v158, %v222
  %v224 = vpop.f32.mrb[0].mxu0
  %225 = vdwg.mxu0
  %v226 = vmax.f32 %v212, 0.0
  %v227 = vmax.f32 %v215, 0.0
  %v228 = vmax.f32 %v220, 0.0
  %v229 = vmax.f32 %v223, 0.0
  %v230 = vld [vmem:[%s5] sm:$0x3]
  %v231 = vpack.c.bf16 %v227, %v226
  %v232 = vpack.c.bf16 %v229, %v228
  %v233 = vld [vmem:[%s6] sm:$0xf]
  %235 = vset.pattern.permute.xlu0 0
  %236 = vperm.xlu0 %235, %v233
  %v237 = vpop.permute.xlu0 %236
  %v240 = vsel %vm170, %v230, 0
  %242 = vmatprep.subr.bf16.mxu0 0
  %243 = vmatpush1.bf16.msra.mxu0 %v231
  %244 = vmatprep.subr.bf16.mxu0 0
  %245 = vmatpush1.bf16.msra.mxu0 %v232
  %246 = vmatprep.subr.bf16.mxu0 0
  %247 = vmatpush1.bf16.msra.mxu0 0
  %248 = vmatprep.subr.bf16.mxu0 0
  %249 = vmatpush1.bf16.msra.mxu0 0
  %250 = vmatprep.subr.bf16.mxu0 0
  %251 = vmatpush1.bf16.msra.mxu0 0
  %252 = vmatprep.subr.bf16.mxu0 0
  %253 = vmatpush1.bf16.msra.mxu0 0
  %254 = vmatprep.subr.bf16.mxu0 0
  %255 = vmatpush1.bf16.msra.mxu0 0
  %256 = vmatprep.subr.bf16.mxu0 0
  %257 = vmatpush1.bf16.msra.mxu0 0
  %258 = vmatprep.subr.bf16.mxu0 0
  %259 = vmatpush1.bf16.msra.mxu0 0
  %260 = vmatprep.subr.bf16.mxu0 0
  %261 = vmatpush1.bf16.msra.mxu0 0
  %262 = vmatprep.subr.bf16.mxu0 0
  %263 = vmatpush1.bf16.msra.mxu0 0
  %264 = vmatprep.subr.bf16.mxu0 0
  %265 = vmatpush1.bf16.msra.mxu0 0
  %266 = vmatprep.subr.bf16.mxu0 0
  %267 = vmatpush1.bf16.msra.mxu0 0
  %268 = vmatprep.subr.bf16.mxu0 0
  %269 = vmatpush1.bf16.msra.mxu0 0
  %270 = vmatprep.subr.bf16.mxu0 0
  %271 = vmatpush1.bf16.msra.mxu0 0
  %272 = vmatprep.subr.bf16.mxu0 0
  %273 = vmatpush1.bf16.msra.mxu0 0
  %274 = vmatprep.mubr.bf16.mxu0 0
  %275 = vmatmul.mubr.bf16.gmra.mrb[0].mxu0 %v240
  %v276 = vpop.f32.mrb[0].mxu0
  %v277 = vadd.f32 %v237, %v276
  %v278 = vpop.f32.mrb[0].mxu0
  %v279 = vpop.f32.mrb[0].mxu0
  %v280 = vpop.f32.mrb[0].mxu0
  %281 = vdwg.mxu0
  %v282 = vtanh.pop %v277
  %v283 = vpack.c.bf16 %v282, %v282
  %284 = vst [vmem:[%s7] sm:$0x3] %v283
  // Predicated region
  $region30: #{_forward_prepared.1} parent=0 // pred_check
    _
  $region31: #{_forward_prepared.1} parent=0 // pred_check_branch
    %286 = sbr.rel (0) target = $region33
  $region32: #{_forward_prepared.1} parent=0 // pred_region
    _
  $region33: #{_forward_prepared.1} parent=0 // pred_fallthru
    _
  // Predicated region
  $region34: #{_forward_prepared.1} parent=0 // pred_check
    _
  $region35: #{_forward_prepared.1} parent=0 // pred_check_branch
    %288 = sbr.rel (0) target = $region37
  $region36: #{_forward_prepared.1} parent=0 // pred_region
    _
  $region37: #{_forward_prepared.1} parent=0 // pred_fallthru
    _

</llo_original>
